<compile_context>
chip_gen: v6e
topology: v6e:2x2x1
jax: 0.10.0
libtpu: 0.0.40
codegen_flags: <defaults>
</compile_context>

<pallas_src>
import functools
import math

import jax
import jax.numpy as jnp
from jax.experimental import pallas as pl
from jax.experimental.pallas import tpu as pltpu

# ---------------- config (mirrors MegaTransformerConfig fields used) --------
HIDDEN_SIZE = 32
N_HEADS = 4
D_QUERIES = 8
D_VALUES = 8
N_QUERY_GROUPS = 4          # == N_HEADS so Q/K head counts broadcast exactly
USE_QKV_BIAS = True
USE_GROK_SCALED_ATTN = True

SEQ_LEN = 8
BATCH = 2

Q_OUT = N_QUERY_GROUPS * D_QUERIES     # 32
KV_OUT = N_HEADS * D_QUERIES           # 32
V_OUT = N_HEADS * D_VALUES             # 32
QKV_OUT = Q_OUT + KV_OUT + V_OUT       # 96

# The kernel assumes MHA-style head counts; real GQA (n_query_groups < n_heads)
# would need different q slicing / broadcast semantics.
assert N_QUERY_GROUPS == N_HEADS, "kernel only supports n_query_groups == n_heads"


def _attn_kernel(x_ref, wqkv_ref, bqkv_ref, wo_ref, bo_ref, out_ref, *, seq_len):
    """One grid step = one batch element's (T, H) rows."""
    t = seq_len
    x = x_ref[...]                                             # (T, H) bf16

    # --- fused q/k/v projection: one bf16 MXU matmul, f32 accumulation ---
    qkv = jnp.dot(x, wqkv_ref[...],
                  preferred_element_type=jnp.float32) + bqkv_ref[...]   # (T, 96) f32
    q = qkv[:, :Q_OUT]
    k = qkv[:, Q_OUT:Q_OUT + KV_OUT]
    v = qkv[:, Q_OUT + KV_OUT:]

    scale = 1.0 / math.sqrt(D_QUERIES)
    # fold the grok 1/30 into the pre-tanh scale (one VPU mul instead of two)
    pre = scale / 30.0 if USE_GROK_SCALED_ATTN else scale

    # --- per-head QK^T on the MXU (contract feature dim: no kh.T transpose),
    #     stacked along sublanes into one (n_heads*T, T) block ---
    s_parts = []
    for h in range(N_HEADS):
        qh = q[:, h * D_QUERIES:(h + 1) * D_QUERIES].astype(jnp.bfloat16)
        kh = k[:, h * D_QUERIES:(h + 1) * D_QUERIES].astype(jnp.bfloat16)
        s_parts.append(jax.lax.dot_general(
            qh, kh, (((1,), (1,)), ((), ())),
            preferred_element_type=jnp.float32))
    s = jnp.concatenate(s_parts, axis=0)                       # (n_heads*T, T) f32

    # --- grok scaling, causal mask, softmax: applied ONCE to the stacked block ---
    if USE_GROK_SCALED_ATTN:
        s = 30.0 * jnp.tanh(s * pre)
    else:
        s = s * pre
    row = jax.lax.broadcasted_iota(jnp.int32, s.shape, 0)
    col = jax.lax.broadcasted_iota(jnp.int32, s.shape, 1)
    # row % T = query position within this head's block; diagonal is always
    # unmasked, so -inf masking cannot produce NaN rows.  If an attention_mask
    # / padding path is ever added, switch to a large finite negative.
    mask = (row % t) >= col
    s = jnp.where(mask, s, -jnp.inf)

    s = s - jnp.max(s, axis=-1, keepdims=True)
    p = jnp.exp(s)
    p = p * pl.reciprocal(jnp.sum(p, axis=-1, keepdims=True), approx=True)

    # --- per-head P@V fed straight through W_o's (d_v, H) slice; f32 acc.
    #     No lane concat of contexts. ---
    acc = jnp.zeros((t, HIDDEN_SIZE), jnp.float32)
    for h in range(N_HEADS):
        ph = p[h * t:(h + 1) * t, :].astype(jnp.bfloat16)       # sublane-aligned slice
        vh = v[:, h * D_VALUES:(h + 1) * D_VALUES].astype(jnp.bfloat16)
        ctx_h = jnp.dot(ph, vh, preferred_element_type=jnp.float32)       # (T, dv)
        woh = wo_ref[h]                                          # (dv, H) bf16, untiled-dim index
        acc = acc + jnp.dot(ctx_h.astype(jnp.bfloat16), woh,
                            preferred_element_type=jnp.float32)

    # TODO(synk): last dim 32 (<128) forces a masked store; at real sizes present
    # a lane-dense (>=128-wide) output slab and undo the reshape in the wrapper.
    out_ref[...] = acc + bo_ref[...]


def mega_self_attention(hidden_states, params):
    """hidden_states: (N, T, H) float32.  Returns (N, T, H) float32."""
    n, t, h = hidden_states.shape
    wq, bq, wk, bk, wv, bv, wo, bo = params

    # Fuse projection weights / biases and pre-split W_o per head in the wrapper
    # (free outside the kernel).  MXU operands are cast to bf16 here so their
    # HBM->VMEM DMA bytes are halved too.
    w_qkv = jnp.concatenate([wq, wk, wv], axis=1).astype(jnp.bfloat16)   # (H, 96)
    b_qkv = jnp.concatenate([bq, bk, bv], axis=1)                        # (1, 96) f32
    wo3 = wo.astype(jnp.bfloat16).reshape(N_HEADS, D_VALUES, h)          # (nh, dv, H)
    x = hidden_states.astype(jnp.bfloat16)                               # (N, T, H)

    out = pl.pallas_call(
        functools.partial(_attn_kernel, seq_len=t),
        out_shape=jax.ShapeDtypeStruct((n, t, h), jnp.float32),
        grid_spec=pltpu.PrefetchScalarGridSpec(
            num_scalar_prefetch=0,
            grid=(n,),
            in_specs=[
                pl.BlockSpec((None, t, h), lambda b: (b, 0, 0)),          # x
                pl.BlockSpec((h, QKV_OUT), lambda b: (0, 0)),             # w_qkv
                pl.BlockSpec((1, QKV_OUT), lambda b: (0, 0)),             # b_qkv
                pl.BlockSpec((N_HEADS, D_VALUES, h), lambda b: (0, 0, 0)),  # wo3
                pl.BlockSpec((1, h), lambda b: (0, 0)),                   # bo
            ],
            out_specs=pl.BlockSpec((None, t, h), lambda b: (b, 0, 0)),
        ),
        compiler_params=pltpu.CompilerParams(
            dimension_semantics=("parallel",)),   # v7x: shard batch across both TCs
    )(x, w_qkv, b_qkv, wo3, bo)
    return out


def reference_attention(x, params):
    """Plain-JAX f32 reference mirroring the PyTorch forward exactly."""
    wq, bq, wk, bk, wv, bv, wo, bo = params
    n, t, _ = x.shape
    q = x @ wq + bq[0]
    k = x @ wk + bk[0]
    v = x @ wv + bv[0]
    q = q.reshape(n, t, N_QUERY_GROUPS, D_QUERIES).transpose(0, 2, 1, 3)
    k = k.reshape(n, t, N_HEADS, D_QUERIES).transpose(0, 2, 1, 3)
    v = v.reshape(n, t, N_HEADS, D_VALUES).transpose(0, 2, 1, 3)
    s = jnp.einsum("nhqd,nhkd->nhqk", q, k) / math.sqrt(D_QUERIES)
    if USE_GROK_SCALED_ATTN:
        s = 30.0 * jnp.tanh(s / 30.0)
    causal = jnp.tril(jnp.ones((t, t), dtype=bool))
    s = jnp.where(causal[None, None], s, -jnp.inf)
    p = jax.nn.softmax(s, axis=-1)
    ctx = jnp.einsum("nhqk,nhkd->nhqd", p, v)
    ctx = ctx.transpose(0, 2, 1, 3).reshape(n, t, N_HEADS * D_VALUES)
    return ctx @ wo + bo[0]


def init_params(key):
    ks = jax.random.split(key, 8)
    scale = 0.02
    wq = scale * jax.random.normal(ks[0], (HIDDEN_SIZE, Q_OUT), jnp.float32)
    wk = scale * jax.random.normal(ks[1], (HIDDEN_SIZE, KV_OUT), jnp.float32)
    wv = scale * jax.random.normal(ks[2], (HIDDEN_SIZE, V_OUT), jnp.float32)
    wo = scale * jax.random.normal(ks[3], (V_OUT, HIDDEN_SIZE), jnp.float32)
    if USE_QKV_BIAS:
        bq = scale * jax.random.normal(ks[4], (1, Q_OUT), jnp.float32)
        bk = scale * jax.random.normal(ks[5], (1, KV_OUT), jnp.float32)
        bv = scale * jax.random.normal(ks[6], (1, V_OUT), jnp.float32)
    else:
        bq = jnp.zeros((1, Q_OUT), jnp.float32)
        bk = jnp.zeros((1, KV_OUT), jnp.float32)
        bv = jnp.zeros((1, V_OUT), jnp.float32)
    bo = scale * jax.random.normal(ks[7], (1, HIDDEN_SIZE), jnp.float32)
    return (wq, bq, wk, bk, wv, bv, wo, bo)


if __name__ == "__main__":
    key = jax.random.PRNGKey(0)
    k_x, k_p = jax.random.split(key)
    x = jax.random.normal(k_x, (BATCH, SEQ_LEN, HIDDEN_SIZE), jnp.float32)
    params = init_params(k_p)

    out = mega_self_attention(x, params)
    out = jax.block_until_ready(out)

    ref = reference_attention(x, params)
    assert out.shape == (BATCH, SEQ_LEN, HIDDEN_SIZE)
    # Tolerance loosened for bf16 MXU operands + approx reciprocal (expected).
    assert jnp.allclose(out, ref, atol=1e-2, rtol=5e-2), \
        f"max abs err {jnp.max(jnp.abs(out - ref))}"

    # TODO(synk): rotary_embedding / alibi_bias / heads_activation / KV-cache /
    # dropout paths are disabled by this config and not implemented;
    # attention_probs are not returned.
    print("KERNEL_OK")
</pallas_src>

<mosaic_0001>
module attributes {stable_mosaic.version = 11 : i64} {
  func.func @_attn_kernel(%arg0: i32, %arg1: memref<1x8x32xbf16, #tpu.memory_space<vmem>>, %arg2: memref<32x96xbf16, #tpu.memory_space<vmem>>, %arg3: memref<1x96xf32, #tpu.memory_space<vmem>>, %arg4: memref<4x8x32xbf16, #tpu.memory_space<vmem>>, %arg5: memref<1x32xf32, #tpu.memory_space<vmem>>, %arg6: memref<1x8x32xf32, #tpu.memory_space<vmem>>) attributes {dimension_semantics = [#tpu.dimension_semantics<parallel>], iteration_bounds = array<i64: 2>, scalar_prefetch = 0 : i64, scratch_operands = 0 : i64, tpu.core_type = #tpu.core_type<tc>, window_params = [{transform_indices = @transform_0, window_bounds = array<i64: 1, 8, 32>}, {pipeline_mode = #tpu.pipeline_mode<synchronous>, transform_indices = @transform_1, window_bounds = array<i64: 32, 96>}, {pipeline_mode = #tpu.pipeline_mode<synchronous>, transform_indices = @transform_2, window_bounds = array<i64: 1, 96>}, {pipeline_mode = #tpu.pipeline_mode<synchronous>, transform_indices = @transform_3, window_bounds = array<i64: 4, 8, 32>}, {pipeline_mode = #tpu.pipeline_mode<synchronous>, transform_indices = @transform_4, window_bounds = array<i64: 1, 32>}, {transform_indices = @transform_5, window_bounds = array<i64: 1, 8, 32>}]} {
    %c0 = arith.constant 0 : index
    %c0_0 = arith.constant 0 : index
    %c0_1 = arith.constant 0 : index
    %0 = vector.load %arg1[%c0, %c0_0, %c0_1] : memref<1x8x32xbf16, #tpu.memory_space<vmem>>, vector<1x8x32xbf16>
    %1 = vector.shape_cast %0 : vector<1x8x32xbf16> to vector<8x32xbf16>
    %c0_2 = arith.constant 0 : index
    %c0_3 = arith.constant 0 : index
    %2 = vector.load %arg2[%c0_2, %c0_3] : memref<32x96xbf16, #tpu.memory_space<vmem>>, vector<32x96xbf16>
    %cst = arith.constant dense<0.000000e+00> : vector<8x96xf32>
    %3 = tpu.matmul %1, %2, %cst {dimension_numbers = #tpu.dot_dimension_numbers<[1], [0], [0], [1], [0, 0, 1, 1], [], []>} : vector<8x32xbf16>, vector<32x96xbf16>, vector<8x96xf32> -> vector<8x96xf32>
    %c0_4 = arith.constant 0 : index
    %c0_5 = arith.constant 0 : index
    %4 = vector.load %arg3[%c0_4, %c0_5] : memref<1x96xf32, #tpu.memory_space<vmem>>, vector<1x96xf32>
    %5 = vector.broadcast %4 : vector<1x96xf32> to vector<8x96xf32>
    %6 = arith.addf %3, %5 : vector<8x96xf32>
    %7 = vector.extract_strided_slice %6 {offsets = [0, 0], sizes = [8, 32], strides = [1, 1]} : vector<8x96xf32> to vector<8x32xf32>
    %8 = vector.extract_strided_slice %6 {offsets = [0, 32], sizes = [8, 32], strides = [1, 1]} : vector<8x96xf32> to vector<8x32xf32>
    %9 = vector.extract_strided_slice %6 {offsets = [0, 64], sizes = [8, 32], strides = [1, 1]} : vector<8x96xf32> to vector<8x32xf32>
    %10 = vector.extract_strided_slice %7 {offsets = [0, 0], sizes = [8, 8], strides = [1, 1]} : vector<8x32xf32> to vector<8x8xf32>
    %11 = arith.truncf %10 : vector<8x8xf32> to vector<8x8xbf16>
    %12 = vector.extract_strided_slice %8 {offsets = [0, 0], sizes = [8, 8], strides = [1, 1]} : vector<8x32xf32> to vector<8x8xf32>
    %13 = arith.truncf %12 : vector<8x8xf32> to vector<8x8xbf16>
    %cst_6 = arith.constant dense<0.000000e+00> : vector<8x8xf32>
    %14 = tpu.matmul %11, %13, %cst_6 {dimension_numbers = #tpu.dot_dimension_numbers<[1], [1], [0], [0], [0, 0, 1, 0], [], []>} : vector<8x8xbf16>, vector<8x8xbf16>, vector<8x8xf32> -> vector<8x8xf32>
    %15 = vector.extract_strided_slice %7 {offsets = [0, 8], sizes = [8, 8], strides = [1, 1]} : vector<8x32xf32> to vector<8x8xf32>
    %16 = arith.truncf %15 : vector<8x8xf32> to vector<8x8xbf16>
    %17 = vector.extract_strided_slice %8 {offsets = [0, 8], sizes = [8, 8], strides = [1, 1]} : vector<8x32xf32> to vector<8x8xf32>
    %18 = arith.truncf %17 : vector<8x8xf32> to vector<8x8xbf16>
    %cst_7 = arith.constant dense<0.000000e+00> : vector<8x8xf32>
    %19 = tpu.matmul %16, %18, %cst_7 {dimension_numbers = #tpu.dot_dimension_numbers<[1], [1], [0], [0], [0, 0, 1, 0], [], []>} : vector<8x8xbf16>, vector<8x8xbf16>, vector<8x8xf32> -> vector<8x8xf32>
    %20 = vector.extract_strided_slice %7 {offsets = [0, 16], sizes = [8, 8], strides = [1, 1]} : vector<8x32xf32> to vector<8x8xf32>
    %21 = arith.truncf %20 : vector<8x8xf32> to vector<8x8xbf16>
    %22 = vector.extract_strided_slice %8 {offsets = [0, 16], sizes = [8, 8], strides = [1, 1]} : vector<8x32xf32> to vector<8x8xf32>
    %23 = arith.truncf %22 : vector<8x8xf32> to vector<8x8xbf16>
    %cst_8 = arith.constant dense<0.000000e+00> : vector<8x8xf32>
    %24 = tpu.matmul %21, %23, %cst_8 {dimension_numbers = #tpu.dot_dimension_numbers<[1], [1], [0], [0], [0, 0, 1, 0], [], []>} : vector<8x8xbf16>, vector<8x8xbf16>, vector<8x8xf32> -> vector<8x8xf32>
    %25 = vector.extract_strided_slice %7 {offsets = [0, 24], sizes = [8, 8], strides = [1, 1]} : vector<8x32xf32> to vector<8x8xf32>
    %26 = arith.truncf %25 : vector<8x8xf32> to vector<8x8xbf16>
    %27 = vector.extract_strided_slice %8 {offsets = [0, 24], sizes = [8, 8], strides = [1, 1]} : vector<8x32xf32> to vector<8x8xf32>
    %28 = arith.truncf %27 : vector<8x8xf32> to vector<8x8xbf16>
    %cst_9 = arith.constant dense<0.000000e+00> : vector<8x8xf32>
    %29 = tpu.matmul %26, %28, %cst_9 {dimension_numbers = #tpu.dot_dimension_numbers<[1], [1], [0], [0], [0, 0, 1, 0], [], []>} : vector<8x8xbf16>, vector<8x8xbf16>, vector<8x8xf32> -> vector<8x8xf32>
    %30 = tpu.concatenate %14, %19, %24, %29 in 0 : vector<8x8xf32>, vector<8x8xf32>, vector<8x8xf32>, vector<8x8xf32> -> vector<32x8xf32>
    %cst_10 = arith.constant 0.0117851133 : f32
    %31 = vector.broadcast %cst_10 : f32 to vector<32x8xf32>
    %32 = arith.mulf %30, %31 : vector<32x8xf32>
    %33 = math.tanh %32 : vector<32x8xf32>
    %cst_11 = arith.constant 3.000000e+01 : f32
    %34 = vector.broadcast %cst_11 : f32 to vector<32x8xf32>
    %35 = arith.mulf %34, %33 : vector<32x8xf32>
    %36 = tpu.iota {dimensions = array<i32: 0>} : vector<32x8xi32>
    %37 = tpu.iota {dimensions = array<i32: 1>} : vector<32x8xi32>
    %c8_i32 = arith.constant 8 : i32
    %c0_i32 = arith.constant 0 : i32
    %38 = arith.cmpi eq, %c8_i32, %c0_i32 : i32
    %c1_i32 = arith.constant 1 : i32
    %39 = arith.select %38, %c1_i32, %c8_i32 : i32
    %40 = vector.broadcast %39 : i32 to vector<32x8xi32>
    %41 = arith.remsi %36, %40 : vector<32x8xi32>
    %c0_i32_12 = arith.constant 0 : i32
    %42 = vector.broadcast %c0_i32_12 : i32 to vector<32x8xi32>
    %43 = arith.cmpi ne, %41, %42 : vector<32x8xi32>
    %c0_i32_13 = arith.constant 0 : i32
    %44 = vector.broadcast %c0_i32_13 : i32 to vector<32x8xi32>
    %45 = arith.cmpi slt, %41, %44 : vector<32x8xi32>
    %c0_i32_14 = arith.constant 0 : i32
    %46 = arith.cmpi slt, %39, %c0_i32_14 : i32
    %47 = vector.broadcast %46 : i1 to vector<32x8xi1>
    %48 = vector.broadcast %47 : vector<32x8xi1> to vector<32x8xi1>
    %49 = arith.xori %45, %48 : vector<32x8xi1>
    %50 = arith.andi %49, %43 : vector<32x8xi1>
    %51 = vector.broadcast %39 : i32 to vector<32x8xi32>
    %52 = arith.addi %41, %51 : vector<32x8xi32>
    %53 = arith.select %50, %52, %41 : vector<32x8xi1>, vector<32x8xi32>
    %54 = arith.cmpi sge, %53, %37 : vector<32x8xi32>
    %cst_15 = arith.constant 0xFF800000 : f32
    %55 = vector.broadcast %cst_15 : f32 to vector<32x8xf32>
    %56 = arith.select %54, %35, %55 : vector<32x8xi1>, vector<32x8xf32>
    %cst_16 = arith.constant dense<0xFF800000> : vector<32xf32>
    %57 = vector.multi_reduction <maximumf>, %56, %cst_16 [1] : vector<32x8xf32> to vector<32xf32>
    %58 = vector.shape_cast %57 : vector<32xf32> to vector<32x1xf32>
    %59 = vector.broadcast %58 : vector<32x1xf32> to vector<32x8xf32>
    %60 = arith.subf %56, %59 : vector<32x8xf32>
    %61 = math.exp %60 : vector<32x8xf32>
    %cst_17 = arith.constant dense<0.000000e+00> : vector<32xf32>
    %62 = vector.multi_reduction <add>, %61, %cst_17 [1] : vector<32x8xf32> to vector<32xf32>
    %63 = vector.shape_cast %62 : vector<32xf32> to vector<32x1xf32>
    %64 = tpu.reciprocal %63 {approx = true} : vector<32x1xf32> -> vector<32x1xf32>
    %65 = vector.broadcast %64 : vector<32x1xf32> to vector<32x8xf32>
    %66 = arith.mulf %61, %65 : vector<32x8xf32>
    %cst_18 = arith.constant 0.000000e+00 : f32
    %67 = vector.broadcast %cst_18 : f32 to vector<8x32xf32>
    %68 = vector.extract_strided_slice %66 {offsets = [0, 0], sizes = [8, 8], strides = [1, 1]} : vector<32x8xf32> to vector<8x8xf32>
    %69 = arith.truncf %68 : vector<8x8xf32> to vector<8x8xbf16>
    %70 = vector.extract_strided_slice %9 {offsets = [0, 0], sizes = [8, 8], strides = [1, 1]} : vector<8x32xf32> to vector<8x8xf32>
    %71 = arith.truncf %70 : vector<8x8xf32> to vector<8x8xbf16>
    %cst_19 = arith.constant dense<0.000000e+00> : vector<8x8xf32>
    %72 = tpu.matmul %69, %71, %cst_19 {dimension_numbers = #tpu.dot_dimension_numbers<[1], [0], [0], [1], [0, 0, 1, 1], [], []>} : vector<8x8xbf16>, vector<8x8xbf16>, vector<8x8xf32> -> vector<8x8xf32>
    %c0_20 = arith.constant 0 : index
    %c0_21 = arith.constant 0 : index
    %c0_22 = arith.constant 0 : index
    %73 = vector.load %arg4[%c0_20, %c0_21, %c0_22] : memref<4x8x32xbf16, #tpu.memory_space<vmem>>, vector<1x8x32xbf16>
    %74 = vector.shape_cast %73 : vector<1x8x32xbf16> to vector<8x32xbf16>
    %75 = arith.truncf %72 : vector<8x8xf32> to vector<8x8xbf16>
    %cst_23 = arith.constant dense<0.000000e+00> : vector<8x32xf32>
    %76 = tpu.matmul %75, %74, %cst_23 {dimension_numbers = #tpu.dot_dimension_numbers<[1], [0], [0], [1], [0, 0, 1, 1], [], []>} : vector<8x8xbf16>, vector<8x32xbf16>, vector<8x32xf32> -> vector<8x32xf32>
    %77 = arith.addf %67, %76 : vector<8x32xf32>
    %78 = vector.extract_strided_slice %66 {offsets = [8, 0], sizes = [8, 8], strides = [1, 1]} : vector<32x8xf32> to vector<8x8xf32>
    %79 = arith.truncf %78 : vector<8x8xf32> to vector<8x8xbf16>
    %80 = vector.extract_strided_slice %9 {offsets = [0, 8], sizes = [8, 8], strides = [1, 1]} : vector<8x32xf32> to vector<8x8xf32>
    %81 = arith.truncf %80 : vector<8x8xf32> to vector<8x8xbf16>
    %cst_24 = arith.constant dense<0.000000e+00> : vector<8x8xf32>
    %82 = tpu.matmul %79, %81, %cst_24 {dimension_numbers = #tpu.dot_dimension_numbers<[1], [0], [0], [1], [0, 0, 1, 1], [], []>} : vector<8x8xbf16>, vector<8x8xbf16>, vector<8x8xf32> -> vector<8x8xf32>
    %c1 = arith.constant 1 : index
    %c0_25 = arith.constant 0 : index
    %c0_26 = arith.constant 0 : index
    %83 = vector.load %arg4[%c1, %c0_25, %c0_26] : memref<4x8x32xbf16, #tpu.memory_space<vmem>>, vector<1x8x32xbf16>
    %84 = vector.shape_cast %83 : vector<1x8x32xbf16> to vector<8x32xbf16>
    %85 = arith.truncf %82 : vector<8x8xf32> to vector<8x8xbf16>
    %cst_27 = arith.constant dense<0.000000e+00> : vector<8x32xf32>
    %86 = tpu.matmul %85, %84, %cst_27 {dimension_numbers = #tpu.dot_dimension_numbers<[1], [0], [0], [1], [0, 0, 1, 1], [], []>} : vector<8x8xbf16>, vector<8x32xbf16>, vector<8x32xf32> -> vector<8x32xf32>
    %87 = arith.addf %77, %86 : vector<8x32xf32>
    %88 = vector.extract_strided_slice %66 {offsets = [16, 0], sizes = [8, 8], strides = [1, 1]} : vector<32x8xf32> to vector<8x8xf32>
    %89 = arith.truncf %88 : vector<8x8xf32> to vector<8x8xbf16>
    %90 = vector.extract_strided_slice %9 {offsets = [0, 16], sizes = [8, 8], strides = [1, 1]} : vector<8x32xf32> to vector<8x8xf32>
    %91 = arith.truncf %90 : vector<8x8xf32> to vector<8x8xbf16>
    %cst_28 = arith.constant dense<0.000000e+00> : vector<8x8xf32>
    %92 = tpu.matmul %89, %91, %cst_28 {dimension_numbers = #tpu.dot_dimension_numbers<[1], [0], [0], [1], [0, 0, 1, 1], [], []>} : vector<8x8xbf16>, vector<8x8xbf16>, vector<8x8xf32> -> vector<8x8xf32>
    %c2 = arith.constant 2 : index
    %c0_29 = arith.constant 0 : index
    %c0_30 = arith.constant 0 : index
    %93 = vector.load %arg4[%c2, %c0_29, %c0_30] : memref<4x8x32xbf16, #tpu.memory_space<vmem>>, vector<1x8x32xbf16>
    %94 = vector.shape_cast %93 : vector<1x8x32xbf16> to vector<8x32xbf16>
    %95 = arith.truncf %92 : vector<8x8xf32> to vector<8x8xbf16>
    %cst_31 = arith.constant dense<0.000000e+00> : vector<8x32xf32>
    %96 = tpu.matmul %95, %94, %cst_31 {dimension_numbers = #tpu.dot_dimension_numbers<[1], [0], [0], [1], [0, 0, 1, 1], [], []>} : vector<8x8xbf16>, vector<8x32xbf16>, vector<8x32xf32> -> vector<8x32xf32>
    %97 = arith.addf %87, %96 : vector<8x32xf32>
    %98 = vector.extract_strided_slice %66 {offsets = [24, 0], sizes = [8, 8], strides = [1, 1]} : vector<32x8xf32> to vector<8x8xf32>
    %99 = arith.truncf %98 : vector<8x8xf32> to vector<8x8xbf16>
    %100 = vector.extract_strided_slice %9 {offsets = [0, 24], sizes = [8, 8], strides = [1, 1]} : vector<8x32xf32> to vector<8x8xf32>
    %101 = arith.truncf %100 : vector<8x8xf32> to vector<8x8xbf16>
    %cst_32 = arith.constant dense<0.000000e+00> : vector<8x8xf32>
    %102 = tpu.matmul %99, %101, %cst_32 {dimension_numbers = #tpu.dot_dimension_numbers<[1], [0], [0], [1], [0, 0, 1, 1], [], []>} : vector<8x8xbf16>, vector<8x8xbf16>, vector<8x8xf32> -> vector<8x8xf32>
    %c3 = arith.constant 3 : index
    %c0_33 = arith.constant 0 : index
    %c0_34 = arith.constant 0 : index
    %103 = vector.load %arg4[%c3, %c0_33, %c0_34] : memref<4x8x32xbf16, #tpu.memory_space<vmem>>, vector<1x8x32xbf16>
    %104 = vector.shape_cast %103 : vector<1x8x32xbf16> to vector<8x32xbf16>
    %105 = arith.truncf %102 : vector<8x8xf32> to vector<8x8xbf16>
    %cst_35 = arith.constant dense<0.000000e+00> : vector<8x32xf32>
    %106 = tpu.matmul %105, %104, %cst_35 {dimension_numbers = #tpu.dot_dimension_numbers<[1], [0], [0], [1], [0, 0, 1, 1], [], []>} : vector<8x8xbf16>, vector<8x32xbf16>, vector<8x32xf32> -> vector<8x32xf32>
    %107 = arith.addf %97, %106 : vector<8x32xf32>
    %c0_36 = arith.constant 0 : index
    %c0_37 = arith.constant 0 : index
    %108 = vector.load %arg5[%c0_36, %c0_37] : memref<1x32xf32, #tpu.memory_space<vmem>>, vector<1x32xf32>
    %109 = vector.broadcast %108 : vector<1x32xf32> to vector<8x32xf32>
    %110 = arith.addf %107, %109 : vector<8x32xf32>
    %c0_38 = arith.constant 0 : index
    %c0_39 = arith.constant 0 : index
    %c0_40 = arith.constant 0 : index
    %111 = vector.load %arg6[%c0_38, %c0_39, %c0_40] : memref<1x8x32xf32, #tpu.memory_space<vmem>>, vector<1x8x32xf32>
    %112 = vector.shape_cast %111 : vector<1x8x32xf32> to vector<8x32xf32>
    %113 = vector.shape_cast %110 : vector<8x32xf32> to vector<1x8x32xf32>
    tpu.vector_store %arg6[%c0_38, %c0_39, %c0_40], %113 {strides = array<i32>} : memref<1x8x32xf32, #tpu.memory_space<vmem>>, vector<1x8x32xf32>,
    return
  }
  func.func @transform_0(%arg0: i32) -> (i32, i32, i32) {
    %c0_i32 = arith.constant 0 : i32
    %c0_i32_0 = arith.constant 0 : i32
    %c0_i32_1 = arith.constant 0 : i32
    return %arg0, %c0_i32, %c0_i32_0 : i32, i32, i32
  }
  func.func @transform_1(%arg0: i32) -> (i32, i32) {
    %c0_i32 = arith.constant 0 : i32
    %c0_i32_0 = arith.constant 0 : i32
    %c0_i32_1 = arith.constant 0 : i32
    return %c0_i32, %c0_i32_0 : i32, i32
  }
  func.func @transform_2(%arg0: i32) -> (i32, i32) {
    %c0_i32 = arith.constant 0 : i32
    %c0_i32_0 = arith.constant 0 : i32
    %c0_i32_1 = arith.constant 0 : i32
    return %c0_i32, %c0_i32_0 : i32, i32
  }
  func.func @transform_3(%arg0: i32) -> (i32, i32, i32) {
    %c0_i32 = arith.constant 0 : i32
    %c0_i32_0 = arith.constant 0 : i32
    %c0_i32_1 = arith.constant 0 : i32
    %c0_i32_2 = arith.constant 0 : i32
    return %c0_i32, %c0_i32_0, %c0_i32_1 : i32, i32, i32
  }
  func.func @transform_4(%arg0: i32) -> (i32, i32) {
    %c0_i32 = arith.constant 0 : i32
    %c0_i32_0 = arith.constant 0 : i32
    %c0_i32_1 = arith.constant 0 : i32
    return %c0_i32, %c0_i32_0 : i32, i32
  }
  func.func @transform_5(%arg0: i32) -> (i32, i32, i32) {
    %c0_i32 = arith.constant 0 : i32
    %c0_i32_0 = arith.constant 0 : i32
    %c0_i32_1 = arith.constant 0 : i32
    return %arg0, %c0_i32, %c0_i32_0 : i32, i32, i32
  }
}

</mosaic_0001>

<llo_original>
// kernel: tpu_custom_call.1
$region0: #{tpu_custom_call.1}
  #allocation0 [shape = 'u32[]', space=smem, size = 0x4, offset = 0x4, fixed_abs, tag = 'smem constant byte address 0x4 - core index']
  #allocation1 [shape = 'u32[144,128]{1,0:T(1,128)}', space=vmem, size = 0x12000, scoped, tag = 'internal scratch']
  %s0 = inlined_call_operand.hbm [shape: bf16[2,8,32], index: 0, kind: input, shape index: {}]
  %s1 = inlined_call_operand.hbm [shape: bf16[32,96], index: 1, kind: input, shape index: {}]
  %s2 = inlined_call_operand.vmem [shape: f32[1,96], index: 2, kind: input, shape index: {}]
  %s3 = inlined_call_operand.hbm [shape: bf16[4,8,32], index: 3, kind: input, shape index: {}]
  %s4 = inlined_call_operand.vmem [shape: f32[1,32], index: 4, kind: input, shape index: {}]
  %s5 = inlined_call_operand.hbm [shape: f32[2,8,32], index: 5, kind: output, shape index: {}]
  %s6 = sld [smem:[#allocation0]]
  $region65: #{tpu_custom_call.1} parent=0
    _
  %s8 = ssub.s32 1, %s6
  %s9 = scalar_select 0, %s8, %s6
  $region1: #{tpu_custom_call.1} parent=0
    #allocation2 [shape = 'u8[4096]{0}', space=vmem, size = 0x1000, scoped, tag = 'input window, operand 0']
    #allocation3 [shape = 's32[2]{0}', space=sflag, size = 0x8, scoped, tag = 'scoped memory for tpu_custom_call.1']
    #allocation4 [shape = 's32[2]{0}', space=sflag, size = 0x8, scoped, tag = 'scoped memory for tpu_custom_call.1']
    #allocation5 [shape = 'u8[8192]{0}', space=vmem, size = 0x2000, scoped, tag = 'input window, operand 1, single buffered']
    #allocation6 [shape = 's32[1]{0}', space=sflag, size = 0x4, scoped, tag = 'scoped memory for tpu_custom_call.1']
    #allocation7 [shape = 'u8[8192]{0}', space=vmem, size = 0x2000, scoped, tag = 'input window, operand 3, single buffered']
    #allocation8 [shape = 'u8[8192]{0}', space=vmem, size = 0x2000, scoped, tag = 'output window, operand 0']
    %10 = vsyncpa [#allocation3], 0
    %s11 = scalar_lea.sflag [#allocation3], 1
    %12 = vsyncpa %s11, 0
    %13 = vsyncpa [#allocation6], 0
    %14 = vsyncpa [#allocation4], 0
    %s15 = scalar_lea.sflag [#allocation4], 1
    %16 = vsyncpa %s15, 0
    loop: start=0, step=1, limit=4
    $region2: #{tpu_custom_call.1} parent=1 // loop_pre_header
      _
    $region3: #{tpu_custom_call.1} parent=1 // loop_header
      %s18 = sphi 0, %s22
      %p19 = scmp.ge.s32.totalorder %s18, 4
      %s28 = sphi 0, %s30
      %s31 = sphi 0, %s28
      %s32 = sphi 0, %s31
      %s48 = sphi 0, %s32
      %s52 = sphi 0, %s52
      %s54 = sphi 0, %s52
      %s55 = sphi 0, %s54
      %s69 = sphi 0, %s55
      %s73 = sphi 0, %s73
      %s75 = sphi 0, %s73
      %s76 = sphi 0, %s75
      %s90 = sphi 0, %s76
      %s94 = sphi 0, %s94
      %s96 = sphi 0, %s94
      %s97 = sphi 0, %s96
      %s111 = sphi 0, %s97
      %s115 = sphi 0, %s115
      %s117 = sphi 0, %s115
      %s118 = sphi 0, %s117
      %s132 = sphi 0, %s118
      %s138 = sphi 0, %s140
      %s141 = sphi 0, %s138
      %s142 = sphi 0, %s141
      %s158 = sphi 0, %s142
    $region4: #{tpu_custom_call.1} parent=1 // loop_header_branch
      %21 = sbr.rel (%p19) target = $region8
    $region5: #{tpu_custom_call.1} parent=1 // loop_body
      %s23 = ssub.s32 %s18, 1
      %s24 = ssub.s32 %s18, 2
      %s25 = sadd.s32 %s18, 1
      %s26 = ssub.s32 %s18, %s25
      %p27 = scmp.eq.s32.totalorder %s26, 0
      %s29 = sadd.s32 %s28, 1
      %s30 = scalar_select %p27, %s28, %s29
      %p33 = pneg %p27
      %p34 = scmp.eq.s32.totalorder %s18, 1
      %p35 = por %p33, %p34
      %p36 = scmp.ne.s32.totalorder %s28, %s31
      %p37 = scmp.eq.s32.totalorder %s18, 0
      %p38 = por %p36, %p37
      %p39 = scmp.ne.s32.totalorder %s28, %s31
      %p40 = scmp.eq.s32.totalorder %s23, 1
      %p41 = por %p39, %p40
      %p42 = scmp.ne.s32.totalorder %s31, %s32
      %p43 = scmp.eq.s32.totalorder %s23, 0
      %p44 = por %p42, %p43
      %p45 = scmp.ne.s32.totalorder %s31, %s32
      %p46 = scmp.eq.s32.totalorder %s24, 1
      %p47 = por %p45, %p46
      %p49 = scmp.ne.s32.totalorder %s32, %s48
      %p50 = scmp.eq.s32.totalorder %s24, 0
      %p51 = por %p49, %p50
      %s53 = sadd.s32 %s52, 1
      %p56 = scmp.eq.s32.totalorder %s18, 1
      %p57 = scmp.ne.s32.totalorder %s52, %s54
      %p58 = scmp.eq.s32.totalorder %s18, 0
      %p59 = por %p57, %p58
      %p60 = scmp.ne.s32.totalorder %s52, %s54
      %p61 = scmp.eq.s32.totalorder %s23, 1
      %p62 = por %p60, %p61
      %p63 = scmp.ne.s32.totalorder %s54, %s55
      %p64 = scmp.eq.s32.totalorder %s23, 0
      %p65 = por %p63, %p64
      %p66 = scmp.ne.s32.totalorder %s54, %s55
      %p67 = scmp.eq.s32.totalorder %s24, 1
      %p68 = por %p66, %p67
      %p70 = scmp.ne.s32.totalorder %s55, %s69
      %p71 = scmp.eq.s32.totalorder %s24, 0
      %p72 = por %p70, %p71
      %s74 = sadd.s32 %s73, 1
      %p77 = scmp.eq.s32.totalorder %s18, 1
      %p78 = scmp.ne.s32.totalorder %s73, %s75
      %p79 = scmp.eq.s32.totalorder %s18, 0
      %p80 = por %p78, %p79
      %p81 = scmp.ne.s32.totalorder %s73, %s75
      %p82 = scmp.eq.s32.totalorder %s23, 1
      %p83 = por %p81, %p82
      %p84 = scmp.ne.s32.totalorder %s75, %s76
      %p85 = scmp.eq.s32.totalorder %s23, 0
      %p86 = por %p84, %p85
      %p87 = scmp.ne.s32.totalorder %s75, %s76
      %p88 = scmp.eq.s32.totalorder %s24, 1
      %p89 = por %p87, %p88
      %p91 = scmp.ne.s32.totalorder %s76, %s90
      %p92 = scmp.eq.s32.totalorder %s24, 0
      %p93 = por %p91, %p92
      %s95 = sadd.s32 %s94, 1
      %p98 = scmp.eq.s32.totalorder %s18, 1
      %p99 = scmp.ne.s32.totalorder %s94, %s96
      %p100 = scmp.eq.s32.totalorder %s18, 0
      %p101 = por %p99, %p100
      %p102 = scmp.ne.s32.totalorder %s94, %s96
      %p103 = scmp.eq.s32.totalorder %s23, 1
      %p104 = por %p102, %p103
      %p105 = scmp.ne.s32.totalorder %s96, %s97
      %p106 = scmp.eq.s32.totalorder %s23, 0
      %p107 = por %p105, %p106
      %p108 = scmp.ne.s32.totalorder %s96, %s97
      %p109 = scmp.eq.s32.totalorder %s24, 1
      %p110 = por %p108, %p109
      %p112 = scmp.ne.s32.totalorder %s97, %s111
      %p113 = scmp.eq.s32.totalorder %s24, 0
      %p114 = por %p112, %p113
      %s116 = sadd.s32 %s115, 1
      %p119 = scmp.eq.s32.totalorder %s18, 1
      %p120 = scmp.ne.s32.totalorder %s115, %s117
      %p121 = scmp.eq.s32.totalorder %s18, 0
      %p122 = por %p120, %p121
      %p123 = scmp.ne.s32.totalorder %s115, %s117
      %p124 = scmp.eq.s32.totalorder %s23, 1
      %p125 = por %p123, %p124
      %p126 = scmp.ne.s32.totalorder %s117, %s118
      %p127 = scmp.eq.s32.totalorder %s23, 0
      %p128 = por %p126, %p127
      %p129 = scmp.ne.s32.totalorder %s117, %s118
      %p130 = scmp.eq.s32.totalorder %s24, 1
      %p131 = por %p129, %p130
      %p133 = scmp.ne.s32.totalorder %s118, %s132
      %p134 = scmp.eq.s32.totalorder %s24, 0
      %p135 = por %p133, %p134
      %s136 = ssub.s32 %s18, %s25
      %p137 = scmp.eq.s32.totalorder %s136, 0
      %s139 = sadd.s32 %s138, 1
      %s140 = scalar_select %p137, %s138, %s139
      %p143 = pneg %p137
      %p144 = scmp.eq.s32.totalorder %s18, 1
      %p145 = por %p143, %p144
      %p146 = scmp.ne.s32.totalorder %s138, %s141
      %p147 = scmp.eq.s32.totalorder %s18, 0
      %p148 = por %p146, %p147
      %p149 = scmp.ne.s32.totalorder %s138, %s141
      %p150 = scmp.eq.s32.totalorder %s23, 1
      %p151 = por %p149, %p150
      %p152 = scmp.ne.s32.totalorder %s141, %s142
      %p153 = scmp.eq.s32.totalorder %s23, 0
      %p154 = por %p152, %p153
      %p155 = scmp.ne.s32.totalorder %s141, %s142
      %p156 = scmp.eq.s32.totalorder %s24, 1
      %p157 = por %p155, %p156
      %p159 = scmp.ne.s32.totalorder %s142, %s158
      %p160 = scmp.eq.s32.totalorder %s24, 0
      %p161 = por %p159, %p160
      %p162 = scmp.le.s32.totalorder 1, %s18
      %p163 = scmp.lt.s32.totalorder %s18, 3
      %p164 = pnand %p162, %p163
      %p165 = pneg %p164
      // Predicated region
      $region9: #{tpu_custom_call.1} parent=5 // pred_check
        _
      $region10: #{tpu_custom_call.1} parent=5 // pred_check_branch
        %167 = sbr.rel (%p164) target = $region12
      $region11: #{tpu_custom_call.1} parent=5 // pred_region
        %s168 = ssub.s32 %s18, 1
        // Predicated region
        $region13: #{tpu_custom_call.1} parent=11 // pred_check
          %p169 = pneg %p65
        $region14: #{tpu_custom_call.1} parent=11 // pred_check_branch
          %171 = sbr.rel (%p169) target = $region16
        $region15: #{tpu_custom_call.1} parent=11 // pred_region
          %s173 = ssub.s32 256, 256
          %174 = vsyncadd [#allocation6], %s173
          %s175 = sshll.u32 [#allocation5], 4
          %s176 = int_to_ptr.vmem [resolvable:$true] %s175
          %181 = dma.hbm_to_vmem [thread:$0]  %s1, 256, %s176, [#allocation6], 64, 64, 4
        $region16: #{tpu_custom_call.1} parent=11 // pred_fallthru
          _
        // Predicated region
        $region17: #{tpu_custom_call.1} parent=11 // pred_check
          %p182 = pneg %p86
        $region18: #{tpu_custom_call.1} parent=11 // pred_check_branch
          %184 = sbr.rel (%p182) target = $region20
        $region19: #{tpu_custom_call.1} parent=11 // pred_region
          _
        $region20: #{tpu_custom_call.1} parent=11 // pred_fallthru
          _
        // Predicated region
        $region21: #{tpu_custom_call.1} parent=11 // pred_check
          %p185 = pneg %p107
        $region22: #{tpu_custom_call.1} parent=11 // pred_check_branch
          %187 = sbr.rel (%p185) target = $region24
        $region23: #{tpu_custom_call.1} parent=11 // pred_region
          %s189 = ssub.s32 256, 256
          %190 = vsyncadd [#allocation6], %s189
          %s191 = sshll.u32 [#allocation7], 4
          %s192 = int_to_ptr.vmem [resolvable:$true] %s191
          %197 = dma.hbm_to_vmem [thread:$0]  %s3, 256, %s192, [#allocation6], 64, 64, 4
        $region24: #{tpu_custom_call.1} parent=11 // pred_fallthru
          _
        // Predicated region
        $region25: #{tpu_custom_call.1} parent=11 // pred_check
          %p198 = pneg %p128
        $region26: #{tpu_custom_call.1} parent=11 // pred_check_branch
          %200 = sbr.rel (%p198) target = $region28
        $region27: #{tpu_custom_call.1} parent=11 // pred_region
          _
        $region28: #{tpu_custom_call.1} parent=11 // pred_fallthru
          _
      $region12: #{tpu_custom_call.1} parent=5 // pred_fallthru
        _
      %p201 = scmp.lt.s32.totalorder %s18, 2
      // Predicated region
      $region29: #{tpu_custom_call.1} parent=5 // pred_check
        %p202 = pneg %p201
      $region30: #{tpu_custom_call.1} parent=5 // pred_check_branch
        %204 = sbr.rel (%p202) target = $region32
      $region31: #{tpu_custom_call.1} parent=5 // pred_region
        // Predicated region
        $region33: #{tpu_custom_call.1} parent=31 // pred_check
          %p205 = pneg %p38
        $region34: #{tpu_custom_call.1} parent=31 // pred_check_branch
          %207 = sbr.rel (%p205) target = $region36
        $region35: #{tpu_custom_call.1} parent=31 // pred_region
          %s208 = sand.u32 %s28, 1
          %s209 = scalar_lea.sflag [#allocation3], %s208
          %s210 = sand.u32 %s28, 1
          %s211 = smul.addr %s210, 4
          %s212 = scalar_lea.vmem [#allocation2], %s211
          %s214 = ssub.s32 64, 64
          %215 = vsyncadd %s209, %s214
          %s216 = smul.addr %s18, 64
          %s217 = scalar_lea.hbm %s0, %s216
          %s219 = sshll.u32 %s212, 4
          %s220 = int_to_ptr.vmem [resolvable:$true] %s219
          %222 = dma.hbm_to_vmem [thread:$0]  %s217, 64, %s220, %s209
        $region36: #{tpu_custom_call.1} parent=31 // pred_fallthru
          _
      $region32: #{tpu_custom_call.1} parent=5 // pred_fallthru
        _
      %p223 = scmp.le.s32.totalorder 1, %s18
      %p224 = scmp.lt.s32.totalorder %s18, 3
      %p225 = pnand %p223, %p224
      %p226 = pneg %p225
      // Predicated region
      $region37: #{tpu_custom_call.1} parent=5 // pred_check
        _
      $region38: #{tpu_custom_call.1} parent=5 // pred_check_branch
        %228 = sbr.rel (%p225) target = $region40
      $region39: #{tpu_custom_call.1} parent=5 // pred_region
        %s229 = ssub.s32 %s18, 1
        %s230 = sand.u32 %s31, 1
        %s231 = scalar_lea.sflag [#allocation3], %s230
        %s232 = sand.u32 %s31, 1
        %s233 = smul.addr %s232, 4
        %s234 = scalar_lea.vmem [#allocation2], %s233
        // Predicated region
        $region41: #{tpu_custom_call.1} parent=39 // pred_check
          %p235 = pneg %p44
        $region42: #{tpu_custom_call.1} parent=39 // pred_check_branch
          %237 = sbr.rel (%p235) target = $region44
        $region43: #{tpu_custom_call.1} parent=39 // pred_region
          %238 = dma.done %s231, 64
        $region44: #{tpu_custom_call.1} parent=39 // pred_fallthru
          _
        // Predicated region
        $region45: #{tpu_custom_call.1} parent=39 // pred_check
          %p239 = pneg %p65
        $region46: #{tpu_custom_call.1} parent=39 // pred_check_branch
          %241 = sbr.rel (%p239) target = $region48
        $region47: #{tpu_custom_call.1} parent=39 // pred_region
          %242 = dma.done [#allocation6], 256
        $region48: #{tpu_custom_call.1} parent=39 // pred_fallthru
          _
        // Predicated region
        $region49: #{tpu_custom_call.1} parent=39 // pred_check
          %p243 = pneg %p107
        $region50: #{tpu_custom_call.1} parent=39 // pred_check_branch
          %245 = sbr.rel (%p243) target = $region52
        $region51: #{tpu_custom_call.1} parent=39 // pred_region
          %246 = dma.done [#allocation6], 256
        $region52: #{tpu_custom_call.1} parent=39 // pred_fallthru
          _
        %s247 = sand.u32 %s31, 1
        %s248 = scalar_lea.sflag [#allocation3], %s247
        %s249 = sand.u32 %s31, 1
        %s250 = smul.addr %s249, 4
        %s251 = scalar_lea.vmem [#allocation2], %s250
        %p252 = pneg %p44
        %p253 = pneg %p41
        %p254 = pneg %p65
        %p255 = pneg %p62
        %p256 = pneg %p86
        %p257 = pneg %p83
        %p258 = pneg %p107
        %p259 = pneg %p104
        %p260 = pneg %p128
        %p261 = pneg %p125
        %p262 = pneg %p154
        %p263 = pneg %p151
        %s264 = sand.u32 %s141, 1
        %s265 = scalar_lea.sflag [#allocation4], %s264
        %s266 = sand.u32 %s141, 1
        %s267 = smul.addr %s266, 8
        %s268 = scalar_lea.vmem [#allocation8], %s267
        %v270 = vld [vmem:[%s234] sm:$0xf]
        %v271 = vld [vmem:[#allocation5] sm:$0xf]
        %v272 = vld [vmem:[#allocation5 + $0x4] sm:$0xf]
        %v273 = vld [vmem:[#allocation5 + $0x8] sm:$0xf]
        %v274 = vld [vmem:[#allocation5 + $0xc] sm:$0xf]
        %v275 = vld [vmem:[%s2] sm:$0x1]
        %v277 = vlaneseq
        %v278 = vshrl.u32 %v277, 7
        %v279 = vsub.s32 0, %v278
        %v280 = vrot.slane %v275, %v279
        %v286 = vunpack.c.l.b16 %v271
        %v287 = vunpack.c.l.b16 %v272
        %v288 = vunpack.c.l.b16 %v273
        %v289 = vunpack.c.l.b16 %v274
        %v290 = vpack.c.b16 %v287, %v286
        %v291 = vpack.c.b16 %v289, %v288
        %vm294 = vcmask 261120
        %v296 = vsel %vm294, %v270, 0
        %298 = vmatprep.subr.bf16.mxu0 0
        %299 = vmatpush1.bf16.msra.mxu0 0
        %300 = vmatprep.subr.bf16.mxu0 0
        %301 = vmatpush1.bf16.msra.mxu0 0
        %302 = vmatprep.subr.bf16.mxu0 0
        %303 = vmatpush1.bf16.msra.mxu0 0
        %304 = vmatprep.subr.bf16.mxu0 0
        %305 = vmatpush1.bf16.msra.mxu0 0
        %306 = vmatprep.subr.bf16.mxu0 0
        %307 = vmatpush1.bf16.msra.mxu0 0
        %308 = vmatprep.subr.bf16.mxu0 0
        %309 = vmatpush1.bf16.msra.mxu0 0
        %310 = vmatprep.subr.bf16.mxu0 0
        %311 = vmatpush1.bf16.msra.mxu0 %v291
        %312 = vmatprep.subr.bf16.mxu0 0
        %313 = vmatpush1.bf16.msra.mxu0 %v290
        %314 = vmatprep.subr.bf16.mxu0 0
        %315 = vmatpush2.bf16.msra.mxu0 0
        %316 = vmatprep.subr.bf16.mxu0 0
        %317 = vmatpush2.bf16.msra.mxu0 0
        %318 = vmatprep.subr.bf16.mxu0 0
        %319 = vmatpush2.bf16.msra.mxu0 0
        %320 = vmatprep.subr.bf16.mxu0 0
        %321 = vmatpush2.bf16.msra.mxu0 0
        %322 = vmatprep.subr.bf16.mxu0 0
        %323 = vmatpush2.bf16.msra.mxu0 0
        %324 = vmatprep.subr.bf16.mxu0 0
        %325 = vmatpush2.bf16.msra.mxu0 0
        %326 = vmatprep.subr.bf16.mxu0 0
        %327 = vmatpush2.bf16.msra.mxu0 0
        %328 = vmatprep.subr.bf16.mxu0 0
        %329 = vmatpush2.bf16.msra.mxu0 0
        %330 = vmatprep.mubr.bf16.mxu0 0
        %331 = vmatmul.mubr.bf16.gmra.mxu0 %v296
        %v332 = vpop.f32.mrf.mxu0
        %v333 = vadd.f32 %v280, %v332
        %v334 = vpop.f32.mrf.mxu0
        %v335 = vpop.f32.mrf.mxu0
        %v336 = vpop.f32.mrf.mxu0
        %337 = vdwg.mxu0
        %v338 = vpack.c.bf16 %v333, %v333
        %340 = vrot.lane.b32.xlu0 %v338, 96
        %v341 = vpop.permute.xlu0 %340
        %vm342 = vcmask 64512
        %v344 = vsel %vm342, %v338, 0
        %v347 = vsel %vm342, %v341, 0
        %349 = vmatprep.subr.bf16.mxu0 0
        %350 = vmatpush1.bf16.xpose.msra.mxu0 0
        %351 = vmatprep.subr.bf16.mxu0 0
        %352 = vmatpush1.bf16.xpose.msra.mxu0 0
        %353 = vmatprep.subr.bf16.mxu0 0
        %354 = vmatpush1.bf16.xpose.msra.mxu0 0
        %355 = vmatprep.subr.bf16.mxu0 0
        %356 = vmatpush1.bf16.xpose.msra.mxu0 0
        %357 = vmatprep.subr.bf16.mxu0 0
        %358 = vmatpush1.bf16.xpose.msra.mxu0 0
        %359 = vmatprep.subr.bf16.mxu0 0
        %360 = vmatpush1.bf16.xpose.msra.mxu0 0
        %361 = vmatprep.subr.bf16.mxu0 0
        %362 = vmatpush1.bf16.xpose.msra.mxu0 0
        %363 = vmatprep.subr.bf16.mxu0 0
        %364 = vmatpush1.bf16.xpose.msra.mxu0 %v347
        %365 = vmatprep.subr.bf16.mxu0 0
        %366 = vmatpush2.bf16.xpose.msra.mxu0 0
        %367 = vmatprep.subr.bf16.mxu0 0
        %368 = vmatpush2.bf16.xpose.msra.mxu0 0
        %369 = vmatprep.subr.bf16.mxu0 0
        %370 = vmatpush2.bf16.xpose.msra.mxu0 0
        %371 = vmatprep.subr.bf16.mxu0 0
        %372 = vmatpush2.bf16.xpose.msra.mxu0 0
        %373 = vmatprep.subr.bf16.mxu0 0
        %374 = vmatpush2.bf16.xpose.msra.mxu0 0
        %375 = vmatprep.subr.bf16.mxu0 0
        %376 = vmatpush2.bf16.xpose.msra.mxu0 0
        %377 = vmatprep.subr.bf16.mxu0 0
        %378 = vmatpush2.bf16.xpose.msra.mxu0 0
        %379 = vmatprep.subr.bf16.mxu0 0
        %380 = vmatpush2.bf16.xpose.msra.mxu0 0
        %381 = vmatprep.mubr.bf16.mxu0 0
        %382 = vmatmul.mubr.bf16.gmra.mxu0 %v344
        %v383 = vpop.f32.mrf.mxu0
        %v384 = vadd.f32 0.0, %v383
        %v385 = vpop.f32.mrf.mxu0
        %v386 = vpop.f32.mrf.mxu0
        %v387 = vpop.f32.mrf.mxu0
        %388 = vdwg.mxu0
        %389 = vrot.lane.b32.xlu0 %v338, 120
        %v390 = vpop.permute.xlu0 %389
        %391 = vrot.lane.b32.xlu0 %v338, 88
        %v392 = vpop.permute.xlu0 %391
        %v394 = vsel %vm342, %v390, 0
        %v397 = vsel %vm342, %v392, 0
        %399 = vmatprep.subr.bf16.mxu0 0
        %400 = vmatpush1.bf16.xpose.msra.mxu0 0
        %401 = vmatprep.subr.bf16.mxu0 0
        %402 = vmatpush1.bf16.xpose.msra.mxu0 0
        %403 = vmatprep.subr.bf16.mxu0 0
        %404 = vmatpush1.bf16.xpose.msra.mxu0 0
        %405 = vmatprep.subr.bf16.mxu0 0
        %406 = vmatpush1.bf16.xpose.msra.mxu0 0
        %407 = vmatprep.subr.bf16.mxu0 0
        %408 = vmatpush1.bf16.xpose.msra.mxu0 0
        %409 = vmatprep.subr.bf16.mxu0 0
        %410 = vmatpush1.bf16.xpose.msra.mxu0 0
        %411 = vmatprep.subr.bf16.mxu0 0
        %412 = vmatpush1.bf16.xpose.msra.mxu0 0
        %413 = vmatprep.subr.bf16.mxu0 0
        %414 = vmatpush1.bf16.xpose.msra.mxu0 %v397
        %415 = vmatprep.subr.bf16.mxu0 0
        %416 = vmatpush2.bf16.xpose.msra.mxu0 0
        %417 = vmatprep.subr.bf16.mxu0 0
        %418 = vmatpush2.bf16.xpose.msra.mxu0 0
        %419 = vmatprep.subr.bf16.mxu0 0
        %420 = vmatpush2.bf16.xpose.msra.mxu0 0
        %421 = vmatprep.subr.bf16.mxu0 0
        %422 = vmatpush2.bf16.xpose.msra.mxu0 0
        %423 = vmatprep.subr.bf16.mxu0 0
        %424 = vmatpush2.bf16.xpose.msra.mxu0 0
        %425 = vmatprep.subr.bf16.mxu0 0
        %426 = vmatpush2.bf16.xpose.msra.mxu0 0
        %427 = vmatprep.subr.bf16.mxu0 0
        %428 = vmatpush2.bf16.xpose.msra.mxu0 0
        %429 = vmatprep.subr.bf16.mxu0 0
        %430 = vmatpush2.bf16.xpose.msra.mxu0 0
        %431 = vmatprep.mubr.bf16.mxu0 0
        %432 = vmatmul.mubr.bf16.gmra.mxu0 %v394
        %v433 = vpop.f32.mrf.mxu0
        %v434 = vadd.f32 0.0, %v433
        %v435 = vpop.f32.mrf.mxu0
        %v436 = vpop.f32.mrf.mxu0
        %v437 = vpop.f32.mrf.mxu0
        %438 = vdwg.mxu0
        %439 = vrot.lane.b32.xlu0 %v338, 112
        %v440 = vpop.permute.xlu0 %439
        %441 = vrot.lane.b32.xlu0 %v338, 80
        %v442 = vpop.permute.xlu0 %441
        %v444 = vsel %vm342, %v440, 0
        %v447 = vsel %vm342, %v442, 0
        %449 = vmatprep.subr.bf16.mxu0 0
        %450 = vmatpush1.bf16.xpose.msra.mxu0 0
        %451 = vmatprep.subr.bf16.mxu0 0
        %452 = vmatpush1.bf16.xpose.msra.mxu0 0
        %453 = vmatprep.subr.bf16.mxu0 0
        %454 = vmatpush1.bf16.xpose.msra.mxu0 0
        %455 = vmatprep.subr.bf16.mxu0 0
        %456 = vmatpush1.bf16.xpose.msra.mxu0 0
        %457 = vmatprep.subr.bf16.mxu0 0
        %458 = vmatpush1.bf16.xpose.msra.mxu0 0
        %459 = vmatprep.subr.bf16.mxu0 0
        %460 = vmatpush1.bf16.xpose.msra.mxu0 0
        %461 = vmatprep.subr.bf16.mxu0 0
        %462 = vmatpush1.bf16.xpose.msra.mxu0 0
        %463 = vmatprep.subr.bf16.mxu0 0
        %464 = vmatpush1.bf16.xpose.msra.mxu0 %v447
        %465 = vmatprep.subr.bf16.mxu0 0
        %466 = vmatpush2.bf16.xpose.msra.mxu0 0
        %467 = vmatprep.subr.bf16.mxu0 0
        %468 = vmatpush2.bf16.xpose.msra.mxu0 0
        %469 = vmatprep.subr.bf16.mxu0 0
        %470 = vmatpush2.bf16.xpose.msra.mxu0 0
        %471 = vmatprep.subr.bf16.mxu0 0
        %472 = vmatpush2.bf16.xpose.msra.mxu0 0
        %473 = vmatprep.subr.bf16.mxu0 0
        %474 = vmatpush2.bf16.xpose.msra.mxu0 0
        %475 = vmatprep.subr.bf16.mxu0 0
        %476 = vmatpush2.bf16.xpose.msra.mxu0 0
        %477 = vmatprep.subr.bf16.mxu0 0
        %478 = vmatpush2.bf16.xpose.msra.mxu0 0
        %479 = vmatprep.subr.bf16.mxu0 0
        %480 = vmatpush2.bf16.xpose.msra.mxu0 0
        %481 = vmatprep.mubr.bf16.mxu0 0
        %482 = vmatmul.mubr.bf16.gmra.mxu0 %v444
        %v483 = vpop.f32.mrf.mxu0
        %v484 = vadd.f32 0.0, %v483
        %v485 = vpop.f32.mrf.mxu0
        %v486 = vpop.f32.mrf.mxu0
        %v487 = vpop.f32.mrf.mxu0
        %488 = vdwg.mxu0
        %489 = vrot.lane.b32.xlu0 %v338, 104
        %v490 = vpop.permute.xlu0 %489
        %491 = vrot.lane.b32.xlu0 %v338, 72
        %v492 = vpop.permute.xlu0 %491
        %v494 = vsel %vm342, %v490, 0
        %v497 = vsel %vm342, %v492, 0
        %499 = vmatprep.subr.bf16.mxu0 0
        %500 = vmatpush1.bf16.xpose.msra.mxu0 0
        %501 = vmatprep.subr.bf16.mxu0 0
        %502 = vmatpush1.bf16.xpose.msra.mxu0 0
        %503 = vmatprep.subr.bf16.mxu0 0
        %504 = vmatpush1.bf16.xpose.msra.mxu0 0
        %505 = vmatprep.subr.bf16.mxu0 0
        %506 = vmatpush1.bf16.xpose.msra.mxu0 0
        %507 = vmatprep.subr.bf16.mxu0 0
        %508 = vmatpush1.bf16.xpose.msra.mxu0 0
        %509 = vmatprep.subr.bf16.mxu0 0
        %510 = vmatpush1.bf16.xpose.msra.mxu0 0
        %511 = vmatprep.subr.bf16.mxu0 0
        %512 = vmatpush1.bf16.xpose.msra.mxu0 0
        %513 = vmatprep.subr.bf16.mxu0 0
        %514 = vmatpush1.bf16.xpose.msra.mxu0 %v497
        %515 = vmatprep.subr.bf16.mxu0 0
        %516 = vmatpush2.bf16.xpose.msra.mxu0 0
        %517 = vmatprep.subr.bf16.mxu0 0
        %518 = vmatpush2.bf16.xpose.msra.mxu0 0
        %519 = vmatprep.subr.bf16.mxu0 0
        %520 = vmatpush2.bf16.xpose.msra.mxu0 0
        %521 = vmatprep.subr.bf16.mxu0 0
        %522 = vmatpush2.bf16.xpose.msra.mxu0 0
        %523 = vmatprep.subr.bf16.mxu0 0
        %524 = vmatpush2.bf16.xpose.msra.mxu0 0
        %525 = vmatprep.subr.bf16.mxu0 0
        %526 = vmatpush2.bf16.xpose.msra.mxu0 0
        %527 = vmatprep.subr.bf16.mxu0 0
        %528 = vmatpush2.bf16.xpose.msra.mxu0 0
        %529 = vmatprep.subr.bf16.mxu0 0
        %530 = vmatpush2.bf16.xpose.msra.mxu0 0
        %531 = vmatprep.mubr.bf16.mxu0 0
        %532 = vmatmul.mubr.bf16.gmra.mxu0 %v494
        %v533 = vpop.f32.mrf.mxu0
        %v534 = vadd.f32 0.0, %v533
        %v535 = vpop.f32.mrf.mxu0
        %v536 = vpop.f32.mrf.mxu0
        %v537 = vpop.f32.mrf.mxu0
        %538 = vdwg.mxu0
        %v539 = vmul.f32 %v384, 0.011785113
        %v540 = vmul.f32 %v434, 0.011785113
        %v541 = vmul.f32 %v484, 0.011785113
        %v542 = vmul.f32 %v534, 0.011785113
        %v543 = vtanh.pop %v539
        %v544 = vtanh.pop %v540
        %v545 = vtanh.pop %v541
        %v546 = vtanh.pop %v542
        %v547 = vmul.f32 %v543, 30.0
        %v548 = vmul.f32 %v544, 30.0
        %v549 = vmul.f32 %v545, 30.0
        %v550 = vmul.f32 %v546, 30.0
        %v551 = vlaneseq
        %v552 = vshrl.u32 %v551, 7
        %v553 = vadd.s32 %v552, 8
        %v554 = vadd.s32 %v552, 16
        %v555 = vadd.s32 %v552, 24
        %v556 = vlaneseq
        %v557 = vand.u32 %v556, 127
        %vm558 = vcmp.lt.s32.totalorder %v552, 0
        %v559 = vsub.s32 0, %v552
        %v560 = vsel %vm558, %v559, %v552
        %v561 = vshrl.u32 %v560, 3
        %v562 = vand.u32 %v560, 7
        %v563 = vsub.s32 0, %v562
        %v564 = vsel %vm558, %v563, %v562
        %vm565 = vcmp.lt.s32.totalorder %v553, 0
        %v566 = vsub.s32 0, %v553
        %v567 = vsel %vm565, %v566, %v553
        %v568 = vshrl.u32 %v567, 3
        %v569 = vand.u32 %v567, 7
        %v570 = vsub.s32 0, %v569
        %v571 = vsel %vm565, %v570, %v569
        %vm572 = vcmp.lt.s32.totalorder %v554, 0
        %v573 = vsub.s32 0, %v554
        %v574 = vsel %vm572, %v573, %v554
        %v575 = vshrl.u32 %v574, 3
        %v576 = vand.u32 %v574, 7
        %v577 = vsub.s32 0, %v576
        %v578 = vsel %vm572, %v577, %v576
        %vm579 = vcmp.lt.s32.totalorder %v555, 0
        %v580 = vsub.s32 0, %v555
        %v581 = vsel %vm579, %v580, %v555
        %v582 = vshrl.u32 %v581, 3
        %v583 = vand.u32 %v581, 7
        %v584 = vsub.s32 0, %v583
        %v585 = vsel %vm579, %v584, %v583
        %vm586 = vcmp.ne.s32.totalorder %v564, 0
        %vm587 = vcmp.ne.s32.totalorder %v571, 0
        %vm588 = vcmp.ne.s32.totalorder %v578, 0
        %vm589 = vcmp.ne.s32.totalorder %v585, 0
        %vm590 = vcmp.lt.s32.totalorder %v564, 0
        %vm591 = vcmp.lt.s32.totalorder %v571, 0
        %vm592 = vcmp.lt.s32.totalorder %v578, 0
        %vm593 = vcmp.lt.s32.totalorder %v585, 0
        %vm594 = vmand %vm590, %vm586
        %vm595 = vmand %vm591, %vm587
        %vm596 = vmand %vm592, %vm588
        %vm597 = vmand %vm593, %vm589
        %v598 = vadd.s32 %v564, 8
        %v599 = vadd.s32 %v571, 8
        %v600 = vadd.s32 %v578, 8
        %v601 = vadd.s32 %v585, 8
        %v602 = vsel %vm594, %v598, %v564
        %v603 = vsel %vm595, %v599, %v571
        %v604 = vsel %vm596, %v600, %v578
        %v605 = vsel %vm597, %v601, %v585
        %vm606 = vcmp.ge.s32.totalorder %v602, %v557
        %vm607 = vcmp.ge.s32.totalorder %v603, %v557
        %vm608 = vcmp.ge.s32.totalorder %v604, %v557
        %vm609 = vcmp.ge.s32.totalorder %v605, %v557
        %v610 = vsel %vm606, %v547, -inf
        %v611 = vsel %vm607, %v548, -inf
        %v612 = vsel %vm608, %v549, -inf
        %v613 = vsel %vm609, %v550, -inf
        %v614 = vsel %vm342, %v610, -inf
        %615 = vmax.xlane.f32.xlu0 %v614
        %v616 = vpop.xlane.xlu0 %615
        %v617 = vsel %vm342, %v611, -inf
        %618 = vmax.xlane.f32.xlu0 %v617
        %v619 = vpop.xlane.xlu0 %618
        %v620 = vsel %vm342, %v612, -inf
        %621 = vmax.xlane.f32.xlu0 %v620
        %v622 = vpop.xlane.xlu0 %621
        %v623 = vsel %vm342, %v613, -inf
        %624 = vmax.xlane.f32.xlu0 %v623
        %v625 = vpop.xlane.xlu0 %624
        %v626 = vsub.f32 %v610, %v616
        %v627 = vsub.f32 %v611, %v619
        %v628 = vsub.f32 %v612, %v622
        %v629 = vsub.f32 %v613, %v625
        %v630 = vmul.f32 %v626, 1.442695
        %v631 = vpow.pop %v630
        %v632 = vmul.f32 %v627, 1.442695
        %v633 = vpow.pop %v632
        %v634 = vmul.f32 %v628, 1.442695
        %v635 = vpow.pop %v634
        %v636 = vmul.f32 %v629, 1.442695
        %v637 = vpow.pop %v636
        %v638 = vsel %vm342, %v631, 0.0
        %639 = vadd.xlane.f32.xlu0 %v638
        %v640 = vpop.xlane.xlu0 %639
        %v641 = vsel %vm342, %v633, 0.0
        %642 = vadd.xlane.f32.xlu0 %v641
        %v643 = vpop.xlane.xlu0 %642
        %v644 = vsel %vm342, %v635, 0.0
        %645 = vadd.xlane.f32.xlu0 %v644
        %v646 = vpop.xlane.xlu0 %645
        %v647 = vsel %vm342, %v637, 0.0
        %648 = vadd.xlane.f32.xlu0 %v647
        %v649 = vpop.xlane.xlu0 %648
        %v650 = vrcp.pop %v640
        %v651 = vrcp.pop %v643
        %v652 = vrcp.pop %v646
        %v653 = vrcp.pop %v649
        %v654 = vmul.f32 %v631, %v650
        %v655 = vmul.f32 %v633, %v651
        %v656 = vmul.f32 %v635, %v652
        %v657 = vmul.f32 %v637, %v653
        %v658 = vpack.c.bf16 %v654, %v654
        %659 = vrot.lane.b32.xlu0 %v338, 64
        %v660 = vpop.permute.xlu0 %659
        %v662 = vsel %vm342, %v658, 0
        %vm664 = vcmask 1043456
        %v666 = vsel %vm664, %v660, 0
        %668 = vmatprep.subr.bf16.mxu0 0
        %669 = vmatpush1.bf16.msra.mxu0 0
        %670 = vmatprep.subr.bf16.mxu0 0
        %671 = vmatpush1.bf16.msra.mxu0 0
        %672 = vmatprep.subr.bf16.mxu0 0
        %673 = vmatpush1.bf16.msra.mxu0 0
        %674 = vmatprep.subr.bf16.mxu0 0
        %675 = vmatpush1.bf16.msra.mxu0 0
        %676 = vmatprep.subr.bf16.mxu0 0
        %677 = vmatpush1.bf16.msra.mxu0 0
        %678 = vmatprep.subr.bf16.mxu0 0
        %679 = vmatpush1.bf16.msra.mxu0 0
        %680 = vmatprep.subr.bf16.mxu0 0
        %681 = vmatpush1.bf16.msra.mxu0 0
        %682 = vmatprep.subr.bf16.mxu0 0
        %683 = vmatpush1.bf16.msra.mxu0 %v666
        %684 = vmatprep.subr.bf16.mxu0 0
        %685 = vmatpush2.bf16.msra.mxu0 0
        %686 = vmatprep.subr.bf16.mxu0 0
        %687 = vmatpush2.bf16.msra.mxu0 0
        %688 = vmatprep.subr.bf16.mxu0 0
        %689 = vmatpush2.bf16.msra.mxu0 0
        %690 = vmatprep.subr.bf16.mxu0 0
        %691 = vmatpush2.bf16.msra.mxu0 0
        %692 = vmatprep.subr.bf16.mxu0 0
        %693 = vmatpush2.bf16.msra.mxu0 0
        %694 = vmatprep.subr.bf16.mxu0 0
        %695 = vmatpush2.bf16.msra.mxu0 0
        %696 = vmatprep.subr.bf16.mxu0 0
        %697 = vmatpush2.bf16.msra.mxu0 0
        %698 = vmatprep.subr.bf16.mxu0 0
        %699 = vmatpush2.bf16.msra.mxu0 0
        %700 = vmatprep.mubr.bf16.mxu0 0
        %701 = vmatmul.mubr.bf16.gmra.mxu0 %v662
        %v702 = vpop.f32.mrf.mxu0
        %v703 = vadd.f32 0.0, %v702
        %v704 = vpop.f32.mrf.mxu0
        %v705 = vpop.f32.mrf.mxu0
        %v706 = vpop.f32.mrf.mxu0
        %707 = vdwg.mxu0
        %v708 = vld [vmem:[#allocation7] sm:$0xf]
        %v709 = vpack.c.bf16 %v703, %v703
        %v710 = vpack.c.bf16 %v655, %v655
        %711 = vrot.lane.b32.xlu0 %v338, 56
        %v712 = vpop.permute.xlu0 %711
        %v714 = vsel %vm342, %v710, 0
        %v717 = vsel %vm664, %v712, 0
        %719 = vmatprep.subr.bf16.mxu0 0
        %720 = vmatpush1.bf16.msra.mxu0 0
        %721 = vmatprep.subr.bf16.mxu0 0
        %722 = vmatpush1.bf16.msra.mxu0 0
        %723 = vmatprep.subr.bf16.mxu0 0
        %724 = vmatpush1.bf16.msra.mxu0 0
        %725 = vmatprep.subr.bf16.mxu0 0
        %726 = vmatpush1.bf16.msra.mxu0 0
        %727 = vmatprep.subr.bf16.mxu0 0
        %728 = vmatpush1.bf16.msra.mxu0 0
        %729 = vmatprep.subr.bf16.mxu0 0
        %730 = vmatpush1.bf16.msra.mxu0 0
        %731 = vmatprep.subr.bf16.mxu0 0
        %732 = vmatpush1.bf16.msra.mxu0 0
        %733 = vmatprep.subr.bf16.mxu0 0
        %734 = vmatpush1.bf16.msra.mxu0 %v717
        %735 = vmatprep.subr.bf16.mxu0 0
        %736 = vmatpush2.bf16.msra.mxu0 0
        %737 = vmatprep.subr.bf16.mxu0 0
        %738 = vmatpush2.bf16.msra.mxu0 0
        %739 = vmatprep.subr.bf16.mxu0 0
        %740 = vmatpush2.bf16.msra.mxu0 0
        %741 = vmatprep.subr.bf16.mxu0 0
        %742 = vmatpush2.bf16.msra.mxu0 0
        %743 = vmatprep.subr.bf16.mxu0 0
        %744 = vmatpush2.bf16.msra.mxu0 0
        %745 = vmatprep.subr.bf16.mxu0 0
        %746 = vmatpush2.bf16.msra.mxu0 0
        %747 = vmatprep.subr.bf16.mxu0 0
        %748 = vmatpush2.bf16.msra.mxu0 0
        %749 = vmatprep.subr.bf16.mxu0 0
        %750 = vmatpush2.bf16.msra.mxu0 0
        %751 = vmatprep.mubr.bf16.mxu0 0
        %752 = vmatmul.mubr.bf16.gmra.mxu0 %v714
        %v753 = vpop.f32.mrf.mxu0
        %v754 = vadd.f32 0.0, %v753
        %v755 = vpop.f32.mrf.mxu0
        %v756 = vpop.f32.mrf.mxu0
        %v757 = vpop.f32.mrf.mxu0
        %758 = vdwg.mxu0
        %s759 = scalar_lea.vmem [#allocation7], 4
        %v760 = vld [vmem:[%s759] sm:$0xf]
        %v761 = vpack.c.bf16 %v754, %v754
        %v763 = vsel %vm342, %v761, 0
        %v766 = vsel %vm664, %v760, 0
        %768 = vmatprep.subr.bf16.mxu0 0
        %769 = vmatpush1.bf16.msra.mxu0 0
        %770 = vmatprep.subr.bf16.mxu0 0
        %771 = vmatpush1.bf16.msra.mxu0 0
        %772 = vmatprep.subr.bf16.mxu0 0
        %773 = vmatpush1.bf16.msra.mxu0 0
        %774 = vmatprep.subr.bf16.mxu0 0
        %775 = vmatpush1.bf16.msra.mxu0 0
        %776 = vmatprep.subr.bf16.mxu0 0
        %777 = vmatpush1.bf16.msra.mxu0 0
        %778 = vmatprep.subr.bf16.mxu0 0
        %779 = vmatpush1.bf16.msra.mxu0 0
        %780 = vmatprep.subr.bf16.mxu0 0
        %781 = vmatpush1.bf16.msra.mxu0 0
        %782 = vmatprep.subr.bf16.mxu0 0
        %783 = vmatpush1.bf16.msra.mxu0 %v766
        %784 = vmatprep.subr.bf16.mxu0 0
        %785 = vmatpush2.bf16.msra.mxu0 0
        %786 = vmatprep.subr.bf16.mxu0 0
        %787 = vmatpush2.bf16.msra.mxu0 0
        %788 = vmatprep.subr.bf16.mxu0 0
        %789 = vmatpush2.bf16.msra.mxu0 0
        %790 = vmatprep.subr.bf16.mxu0 0
        %791 = vmatpush2.bf16.msra.mxu0 0
        %792 = vmatprep.subr.bf16.mxu0 0
        %793 = vmatpush2.bf16.msra.mxu0 0
        %794 = vmatprep.subr.bf16.mxu0 0
        %795 = vmatpush2.bf16.msra.mxu0 0
        %796 = vmatprep.subr.bf16.mxu0 0
        %797 = vmatpush2.bf16.msra.mxu0 0
        %798 = vmatprep.subr.bf16.mxu0 0
        %799 = vmatpush2.bf16.msra.mxu0 0
        %800 = vmatprep.mubr.bf16.mxu0 0
        %801 = vmatmul.mubr.bf16.gmra.mxu0 %v763
        %v802 = vpop.f32.mrf.mxu0
        %v803 = vadd.f32 0.0, %v802
        %v804 = vpop.f32.mrf.mxu0
        %v805 = vpop.f32.mrf.mxu0
        %v806 = vpop.f32.mrf.mxu0
        %807 = vdwg.mxu0
        %v809 = vsel %vm342, %v709, 0
        %v812 = vsel %vm664, %v708, 0
        %814 = vmatprep.subr.bf16.mxu0 0
        %815 = vmatpush1.bf16.msra.mxu0 0
        %816 = vmatprep.subr.bf16.mxu0 0
        %817 = vmatpush1.bf16.msra.mxu0 0
        %818 = vmatprep.subr.bf16.mxu0 0
        %819 = vmatpush1.bf16.msra.mxu0 0
        %820 = vmatprep.subr.bf16.mxu0 0
        %821 = vmatpush1.bf16.msra.mxu0 0
        %822 = vmatprep.subr.bf16.mxu0 0
        %823 = vmatpush1.bf16.msra.mxu0 0
        %824 = vmatprep.subr.bf16.mxu0 0
        %825 = vmatpush1.bf16.msra.mxu0 0
        %826 = vmatprep.subr.bf16.mxu0 0
        %827 = vmatpush1.bf16.msra.mxu0 0
        %828 = vmatprep.subr.bf16.mxu0 0
        %829 = vmatpush1.bf16.msra.mxu0 %v812
        %830 = vmatprep.subr.bf16.mxu0 0
        %831 = vmatpush2.bf16.msra.mxu0 0
        %832 = vmatprep.subr.bf16.mxu0 0
        %833 = vmatpush2.bf16.msra.mxu0 0
        %834 = vmatprep.subr.bf16.mxu0 0
        %835 = vmatpush2.bf16.msra.mxu0 0
        %836 = vmatprep.subr.bf16.mxu0 0
        %837 = vmatpush2.bf16.msra.mxu0 0
        %838 = vmatprep.subr.bf16.mxu0 0
        %839 = vmatpush2.bf16.msra.mxu0 0
        %840 = vmatprep.subr.bf16.mxu0 0
        %841 = vmatpush2.bf16.msra.mxu0 0
        %842 = vmatprep.subr.bf16.mxu0 0
        %843 = vmatpush2.bf16.msra.mxu0 0
        %844 = vmatprep.subr.bf16.mxu0 0
        %845 = vmatpush2.bf16.msra.mxu0 0
        %846 = vmatprep.mubr.bf16.mxu0 0
        %847 = vmatmul.mubr.bf16.gmra.mxu0 %v809
        %v848 = vpop.f32.mrf.mxu0
        %v849 = vadd.f32 %v803, %v848
        %v850 = vpop.f32.mrf.mxu0
        %v851 = vpop.f32.mrf.mxu0
        %v852 = vpop.f32.mrf.mxu0
        %853 = vdwg.mxu0
        %v854 = vpack.c.bf16 %v656, %v656
        %855 = vrot.lane.b32.xlu0 %v338, 48
        %v856 = vpop.permute.xlu0 %855
        %v858 = vsel %vm342, %v854, 0
        %v861 = vsel %vm664, %v856, 0
        %863 = vmatprep.subr.bf16.mxu0 0
        %864 = vmatpush1.bf16.msra.mxu0 0
        %865 = vmatprep.subr.bf16.mxu0 0
        %866 = vmatpush1.bf16.msra.mxu0 0
        %867 = vmatprep.subr.bf16.mxu0 0
        %868 = vmatpush1.bf16.msra.mxu0 0
        %869 = vmatprep.subr.bf16.mxu0 0
        %870 = vmatpush1.bf16.msra.mxu0 0
        %871 = vmatprep.subr.bf16.mxu0 0
        %872 = vmatpush1.bf16.msra.mxu0 0
        %873 = vmatprep.subr.bf16.mxu0 0
        %874 = vmatpush1.bf16.msra.mxu0 0
        %875 = vmatprep.subr.bf16.mxu0 0
        %876 = vmatpush1.bf16.msra.mxu0 0
        %877 = vmatprep.subr.bf16.mxu0 0
        %878 = vmatpush1.bf16.msra.mxu0 %v861
        %879 = vmatprep.subr.bf16.mxu0 0
        %880 = vmatpush2.bf16.msra.mxu0 0
        %881 = vmatprep.subr.bf16.mxu0 0
        %882 = vmatpush2.bf16.msra.mxu0 0
        %883 = vmatprep.subr.bf16.mxu0 0
        %884 = vmatpush2.bf16.msra.mxu0 0
        %885 = vmatprep.subr.bf16.mxu0 0
        %886 = vmatpush2.bf16.msra.mxu0 0
        %887 = vmatprep.subr.bf16.mxu0 0
        %888 = vmatpush2.bf16.msra.mxu0 0
        %889 = vmatprep.subr.bf16.mxu0 0
        %890 = vmatpush2.bf16.msra.mxu0 0
        %891 = vmatprep.subr.bf16.mxu0 0
        %892 = vmatpush2.bf16.msra.mxu0 0
        %893 = vmatprep.subr.bf16.mxu0 0
        %894 = vmatpush2.bf16.msra.mxu0 0
        %895 = vmatprep.mubr.bf16.mxu0 0
        %896 = vmatmul.mubr.bf16.gmra.mxu0 %v858
        %v897 = vpop.f32.mrf.mxu0
        %v898 = vadd.f32 0.0, %v897
        %v899 = vpop.f32.mrf.mxu0
        %v900 = vpop.f32.mrf.mxu0
        %v901 = vpop.f32.mrf.mxu0
        %902 = vdwg.mxu0
        %s903 = scalar_lea.vmem [#allocation7], 8
        %v904 = vld [vmem:[%s903] sm:$0xf]
        %v905 = vpack.c.bf16 %v898, %v898
        %v907 = vsel %vm342, %v905, 0
        %v910 = vsel %vm664, %v904, 0
        %912 = vmatprep.subr.bf16.mxu0 0
        %913 = vmatpush1.bf16.msra.mxu0 0
        %914 = vmatprep.subr.bf16.mxu0 0
        %915 = vmatpush1.bf16.msra.mxu0 0
        %916 = vmatprep.subr.bf16.mxu0 0
        %917 = vmatpush1.bf16.msra.mxu0 0
        %918 = vmatprep.subr.bf16.mxu0 0
        %919 = vmatpush1.bf16.msra.mxu0 0
        %920 = vmatprep.subr.bf16.mxu0 0
        %921 = vmatpush1.bf16.msra.mxu0 0
        %922 = vmatprep.subr.bf16.mxu0 0
        %923 = vmatpush1.bf16.msra.mxu0 0
        %924 = vmatprep.subr.bf16.mxu0 0
        %925 = vmatpush1.bf16.msra.mxu0 0
        %926 = vmatprep.subr.bf16.mxu0 0
        %927 = vmatpush1.bf16.msra.mxu0 %v910
        %928 = vmatprep.subr.bf16.mxu0 0
        %929 = vmatpush2.bf16.msra.mxu0 0
        %930 = vmatprep.subr.bf16.mxu0 0
        %931 = vmatpush2.bf16.msra.mxu0 0
        %932 = vmatprep.subr.bf16.mxu0 0
        %933 = vmatpush2.bf16.msra.mxu0 0
        %934 = vmatprep.subr.bf16.mxu0 0
        %935 = vmatpush2.bf16.msra.mxu0 0
        %936 = vmatprep.subr.bf16.mxu0 0
        %937 = vmatpush2.bf16.msra.mxu0 0
        %938 = vmatprep.subr.bf16.mxu0 0
        %939 = vmatpush2.bf16.msra.mxu0 0
        %940 = vmatprep.subr.bf16.mxu0 0
        %941 = vmatpush2.bf16.msra.mxu0 0
        %942 = vmatprep.subr.bf16.mxu0 0
        %943 = vmatpush2.bf16.msra.mxu0 0
        %944 = vmatprep.mubr.bf16.mxu0 0
        %945 = vmatmul.mubr.bf16.gmra.mxu0 %v907
        %v946 = vpop.f32.mrf.mxu0
        %v947 = vadd.f32 0.0, %v946
        %v948 = vpop.f32.mrf.mxu0
        %v949 = vpop.f32.mrf.mxu0
        %v950 = vpop.f32.mrf.mxu0
        %951 = vdwg.mxu0
        %v952 = vadd.f32 %v849, %v947
        %v953 = vpack.c.bf16 %v657, %v657
        %954 = vrot.lane.b32.xlu0 %v338, 40
        %v955 = vpop.permute.xlu0 %954
        %v957 = vsel %vm342, %v953, 0
        %v960 = vsel %vm664, %v955, 0
        %962 = vmatprep.subr.bf16.mxu0 0
        %963 = vmatpush1.bf16.msra.mxu0 0
        %964 = vmatprep.subr.bf16.mxu0 0
        %965 = vmatpush1.bf16.msra.mxu0 0
        %966 = vmatprep.subr.bf16.mxu0 0
        %967 = vmatpush1.bf16.msra.mxu0 0
        %968 = vmatprep.subr.bf16.mxu0 0
        %969 = vmatpush1.bf16.msra.mxu0 0
        %970 = vmatprep.subr.bf16.mxu0 0
        %971 = vmatpush1.bf16.msra.mxu0 0
        %972 = vmatprep.subr.bf16.mxu0 0
        %973 = vmatpush1.bf16.msra.mxu0 0
        %974 = vmatprep.subr.bf16.mxu0 0
        %975 = vmatpush1.bf16.msra.mxu0 0
        %976 = vmatprep.subr.bf16.mxu0 0
        %977 = vmatpush1.bf16.msra.mxu0 %v960
        %978 = vmatprep.subr.bf16.mxu0 0
        %979 = vmatpush2.bf16.msra.mxu0 0
        %980 = vmatprep.subr.bf16.mxu0 0
        %981 = vmatpush2.bf16.msra.mxu0 0
        %982 = vmatprep.subr.bf16.mxu0 0
        %983 = vmatpush2.bf16.msra.mxu0 0
        %984 = vmatprep.subr.bf16.mxu0 0
        %985 = vmatpush2.bf16.msra.mxu0 0
        %986 = vmatprep.subr.bf16.mxu0 0
        %987 = vmatpush2.bf16.msra.mxu0 0
        %988 = vmatprep.subr.bf16.mxu0 0
        %989 = vmatpush2.bf16.msra.mxu0 0
        %990 = vmatprep.subr.bf16.mxu0 0
        %991 = vmatpush2.bf16.msra.mxu0 0
        %992 = vmatprep.subr.bf16.mxu0 0
        %993 = vmatpush2.bf16.msra.mxu0 0
        %994 = vmatprep.mubr.bf16.mxu0 0
        %995 = vmatmul.mubr.bf16.gmra.mxu0 %v957
        %v996 = vpop.f32.mrf.mxu0
        %v997 = vadd.f32 0.0, %v996
        %v998 = vpop.f32.mrf.mxu0
        %v999 = vpop.f32.mrf.mxu0
        %v1000 = vpop.f32.mrf.mxu0
        %1001 = vdwg.mxu0
        %s1002 = scalar_lea.vmem [#allocation7], 12
        %v1003 = vld [vmem:[%s1002] sm:$0xf]
        %v1004 = vpack.c.bf16 %v997, %v997
        %v1006 = vsel %vm342, %v1004, 0
        %v1009 = vsel %vm664, %v1003, 0
        %1011 = vmatprep.subr.bf16.mxu0 0
        %1012 = vmatpush1.bf16.msra.mxu0 0
        %1013 = vmatprep.subr.bf16.mxu0 0
        %1014 = vmatpush1.bf16.msra.mxu0 0
        %1015 = vmatprep.subr.bf16.mxu0 0
        %1016 = vmatpush1.bf16.msra.mxu0 0
        %1017 = vmatprep.subr.bf16.mxu0 0
        %1018 = vmatpush1.bf16.msra.mxu0 0
        %1019 = vmatprep.subr.bf16.mxu0 0
        %1020 = vmatpush1.bf16.msra.mxu0 0
        %1021 = vmatprep.subr.bf16.mxu0 0
        %1022 = vmatpush1.bf16.msra.mxu0 0
        %1023 = vmatprep.subr.bf16.mxu0 0
        %1024 = vmatpush1.bf16.msra.mxu0 0
        %1025 = vmatprep.subr.bf16.mxu0 0
        %1026 = vmatpush1.bf16.msra.mxu0 %v1009
        %1027 = vmatprep.subr.bf16.mxu0 0
        %1028 = vmatpush2.bf16.msra.mxu0 0
        %1029 = vmatprep.subr.bf16.mxu0 0
        %1030 = vmatpush2.bf16.msra.mxu0 0
        %1031 = vmatprep.subr.bf16.mxu0 0
        %1032 = vmatpush2.bf16.msra.mxu0 0
        %1033 = vmatprep.subr.bf16.mxu0 0
        %1034 = vmatpush2.bf16.msra.mxu0 0
        %1035 = vmatprep.subr.bf16.mxu0 0
        %1036 = vmatpush2.bf16.msra.mxu0 0
        %1037 = vmatprep.subr.bf16.mxu0 0
        %1038 = vmatpush2.bf16.msra.mxu0 0
        %1039 = vmatprep.subr.bf16.mxu0 0
        %1040 = vmatpush2.bf16.msra.mxu0 0
        %1041 = vmatprep.subr.bf16.mxu0 0
        %1042 = vmatpush2.bf16.msra.mxu0 0
        %1043 = vmatprep.mubr.bf16.mxu0 0
        %1044 = vmatmul.mubr.bf16.gmra.mxu0 %v1006
        %v1045 = vpop.f32.mrf.mxu0
        %v1046 = vadd.f32 0.0, %v1045
        %v1047 = vpop.f32.mrf.mxu0
        %v1048 = vpop.f32.mrf.mxu0
        %v1049 = vpop.f32.mrf.mxu0
        %1050 = vdwg.mxu0
        %v1051 = vadd.f32 %v952, %v1046
        %v1052 = vld [vmem:[%s4] sm:$0x1]
        %v1054 = vlaneseq
        %v1055 = vshrl.u32 %v1054, 7
        %v1056 = vsub.s32 0, %v1055
        %v1057 = vrot.slane %v1052, %v1056
        %v1059 = vadd.f32 %v1051, %v1057
        %1060 = vst.msk [vmem:[%s268] sm:$0xff] %vm294, %v1059
        %s1061 = sand.u32 %s141, 1
        %s1062 = scalar_lea.sflag [#allocation4], %s1061
        %s1063 = sand.u32 %s141, 1
        %s1064 = smul.addr %s1063, 8
        %s1065 = scalar_lea.vmem [#allocation8], %s1064
        // Predicated region
        $region53: #{tpu_custom_call.1} parent=39 // pred_check
          %p1066 = pneg %p151
        $region54: #{tpu_custom_call.1} parent=39 // pred_check_branch
          %1068 = sbr.rel (%p1066) target = $region56
        $region55: #{tpu_custom_call.1} parent=39 // pred_region
          %s1070 = ssub.s32 128, 128
          %1071 = vsyncadd %s1062, %s1070
          %s1072 = smul.addr %s23, 128
          %s1073 = scalar_lea.hbm %s5, %s1072
          %s1075 = sshll.u32 %s1065, 4
          %s1076 = int_to_ptr.vmem [resolvable:$true] %s1075
          %1078 = dma.vmem_to_hbm [thread:$0]  %s1076, 128, %s1073, %s1062
        $region56: #{tpu_custom_call.1} parent=39 // pred_fallthru
          _
      $region40: #{tpu_custom_call.1} parent=5 // pred_fallthru
        _
      %p1079 = scmp.le.s32.totalorder 2, %s18
      // Predicated region
      $region57: #{tpu_custom_call.1} parent=5 // pred_check
        %p1080 = pneg %p1079
      $region58: #{tpu_custom_call.1} parent=5 // pred_check_branch
        %1082 = sbr.rel (%p1080) target = $region60
      $region59: #{tpu_custom_call.1} parent=5 // pred_region
        %s1083 = ssub.s32 %s18, 2
        // Predicated region
        $region61: #{tpu_custom_call.1} parent=59 // pred_check
          %p1084 = pneg %p157
        $region62: #{tpu_custom_call.1} parent=59 // pred_check_branch
          %1086 = sbr.rel (%p1084) target = $region64
        $region63: #{tpu_custom_call.1} parent=59 // pred_region
          %s1087 = sand.u32 %s142, 1
          %s1088 = scalar_lea.sflag [#allocation4], %s1087
          %s1089 = sand.u32 %s142, 1
          %s1090 = smul.addr %s1089, 8
          %s1091 = scalar_lea.vmem [#allocation8], %s1090
          %1092 = dma.done %s1088, 128
        $region64: #{tpu_custom_call.1} parent=59 // pred_fallthru
          _
      $region60: #{tpu_custom_call.1} parent=5 // pred_fallthru
        _
    $region6: #{tpu_custom_call.1} parent=1 // loop_footer
      %s22 = sadd.s32 1, %s18
    $region7: #{tpu_custom_call.1} parent=1 // loop_footer_branch
      %17 = sbr.rel target = $region3
    $region8: #{tpu_custom_call.1} parent=1 // loop_exit
      _
    %1093 = vsyncpa [#allocation3], 1
    %s1094 = scalar_lea.sflag [#allocation3], 1
    %1095 = vsyncpa %s1094, 1
    %1096 = vsyncpa [#allocation6], 1
    %1097 = vsyncpa [#allocation4], 1
    %s1098 = scalar_lea.sflag [#allocation4], 1
    %1099 = vsyncpa %s1098, 1

</llo_original>
